<compile_context>
chip_gen: v5e
topology: v5e:2x2
jax: 0.10.0
libtpu: 0.0.40
codegen_flags: <defaults>
</compile_context>

<pallas_src>
import jax
import jax.numpy as jnp
from jax import lax
from jax.experimental import pallas as pl
from jax.experimental.pallas import tpu as pltpu

# Module hyperparameters (from the PyTorch script).
BATCH_SIZE = 1
HIDDEN_SIZE = 4
INPUT_SIZE = 4
NUM_LAYERS = 1          # single layer only, as in the module
SEQ_LEN = 8             # example sequence length


def _tree_sum(terms):
    """Pairwise (balanced) add tree: depth ~log2(n) instead of n-1 dependent adds."""
    terms = list(terms)
    while len(terms) > 1:
        nxt = []
        for j in range(0, len(terms), 2):
            if j + 1 < len(terms):
                nxt.append(terms[j] + terms[j + 1])
            else:
                nxt.append(terms[j])
        terms = nxt
    return terms[0]


def rnn_forward(x, w_ih, w_hh, b_ih, b_hh):
    """x: (S, B, I) float32 (torch.nn.RNN default layout). Returns (S*B, H) float32."""
    S, B, I = x.shape
    H = w_ih.shape[0]
    SB = S * B
    C = max(I, H)  # common column width for the packed slab

    # ---- Wrapper-side layout plumbing: pack everything into ONE slab ------------
    #   rows [0,        SB)        : x reshaped to (S*B, I)   (cols 0:I)
    #   rows [SB,       SB+I)      : W_ih^T  (I, H)           (cols 0:H)
    #   rows [SB+I,     SB+I+H)    : W_hh^T  (H, H)           (cols 0:H)
    #   rows [SB+I+H,   SB+I+H+1)  : b_ih + b_hh  (1, H)      (cols 0:H)
    # padded with zero rows to a multiple of 8 sublanes.
    def pad_cols(a):
        return jnp.pad(a, ((0, 0), (0, C - a.shape[1])))

    x2d = x.reshape(SB, I)
    packed = jnp.concatenate(
        [
            pad_cols(x2d.astype(jnp.float32)),
            pad_cols(w_ih.T.astype(jnp.float32)),
            pad_cols(w_hh.T.astype(jnp.float32)),
            pad_cols((b_ih + b_hh).reshape(1, H).astype(jnp.float32)),
        ],
        axis=0,
    )
    n_rows = packed.shape[0]
    pad_rows = (-n_rows) % 8
    slab = jnp.pad(packed, ((0, pad_rows), (0, 0)))  # ((SB+I+H+1) padded to 8k, C)

    def kernel(slab_ref, out_ref):
        slab_v = slab_ref[...]

        # Static slices of the single VMEM-resident slab (no extra DMAs).
        x_v = slab_v[0:SB, 0:I]                        # (S*B, I)
        wih = slab_v[SB:SB + I, 0:H]                   # (I, H)  = W_ih^T
        whh = slab_v[SB + I:SB + I + H, 0:H]           # (H, H)  = W_hh^T
        bias = slab_v[SB + I + H:SB + I + H + 1, 0:H]  # (1, H)  = b_ih + b_hh

        # ---- Input projection on the VPU: pre = bias + sum_i x[:, i] * W_ih^T[i, :]
        # I broadcast-MACs over the full (S*B, H) slab; bias broadcast exactly once.
        proj_terms = [x_v[:, i:i + 1] * wih[i:i + 1, :] for i in range(I)]
        pre = _tree_sum(proj_terms) + bias             # (S*B, H)

        # ---- Hoisted loop-invariant W_hh^T rows (sublane slices built once) ------
        whh_rows = [whh[k:k + 1, :] for k in range(H)]

        # ---- Sequential recurrence, fully unrolled -------------------------------
        outs = []
        # Step 0: h_0 == 0, so the recurrence term vanishes.
        h = jnp.tanh(pre[0:B, :])                      # EUP slot
        outs.append(h)
        for t in range(1, S):
            acc = pre[t * B:(t + 1) * B, :]            # (B, H), static slice
            prods = [h[:, k:k + 1] * whh_rows[k] for k in range(H)]
            h = jnp.tanh(acc + _tree_sum(prods))       # shallow add tree + EUP tanh
            outs.append(h)

        # ---- One full store at the end (no per-step partial stores) --------------
        out_ref[...] = jnp.concatenate(outs, axis=0)   # (S*B, H)

    return pl.pallas_call(
        kernel,
        out_shape=jax.ShapeDtypeStruct((SB, H), jnp.float32),
        # No grid: single input DMA (packed slab) + single output DMA.
        in_specs=[pl.BlockSpec(memory_space=pltpu.MemorySpace.VMEM)],
        out_specs=pl.BlockSpec(memory_space=pltpu.MemorySpace.VMEM),
    )(slab)


def rnn_reference(x, w_ih, w_hh, b_ih, b_hh):
    """Pure-JAX reference (lax.scan) matching torch.nn.RNN(tanh) semantics."""
    S, B, I = x.shape
    H = w_ih.shape[0]
    h0 = jnp.zeros((B, H), jnp.float32)

    def step(h, x_t):
        h_new = jnp.tanh(x_t @ w_ih.T + b_ih + h @ w_hh.T + b_hh)
        return h_new, h_new

    _, outs = lax.scan(step, h0, x)
    return outs.reshape(-1, H)


if __name__ == "__main__":
    key = jax.random.PRNGKey(0)
    kx, k1, k2, k3, k4 = jax.random.split(key, 5)

    # Deterministic parameter init, matching torch.nn.RNN shapes:
    #   weight_ih_l0: (H, I), weight_hh_l0: (H, H), bias_ih_l0: (H,), bias_hh_l0: (H,)
    bound = 1.0 / (HIDDEN_SIZE ** 0.5)
    w_ih = jax.random.uniform(k1, (HIDDEN_SIZE, INPUT_SIZE), jnp.float32, -bound, bound)
    w_hh = jax.random.uniform(k2, (HIDDEN_SIZE, HIDDEN_SIZE), jnp.float32, -bound, bound)
    b_ih = jax.random.uniform(k3, (HIDDEN_SIZE,), jnp.float32, -bound, bound)
    b_hh = jax.random.uniform(k4, (HIDDEN_SIZE,), jnp.float32, -bound, bound)

    # Input in PyTorch RNN default layout: (seq_len, batch, input_size)
    x = jax.random.normal(kx, (SEQ_LEN, BATCH_SIZE, INPUT_SIZE), jnp.float32)

    out = rnn_forward(x, w_ih, w_hh, b_ih, b_hh)
    out = jax.block_until_ready(out)

    ref = rnn_reference(x, w_ih, w_hh, b_ih, b_hh)
    assert out.shape == (SEQ_LEN * BATCH_SIZE, HIDDEN_SIZE)
    assert jnp.allclose(out, ref, atol=1e-5, rtol=1e-5)

    print("KERNEL_OK")
</pallas_src>

<mosaic_0001>
module attributes {stable_mosaic.version = 11 : i64} {
  func.func @kernel(%arg0: memref<24x4xf32, #tpu.memory_space<vmem>>, %arg1: memref<8x4xf32, #tpu.memory_space<vmem>>) attributes {dimension_semantics = [], scalar_prefetch = 0 : i64, scratch_operands = 0 : i64, tpu.core_type = #tpu.core_type<tc>} {
    %c0 = arith.constant 0 : index
    %c0_0 = arith.constant 0 : index
    %0 = vector.load %arg0[%c0, %c0_0] : memref<24x4xf32, #tpu.memory_space<vmem>>, vector<24x4xf32>
    %1 = vector.extract_strided_slice %0 {offsets = [0, 0], sizes = [8, 4], strides = [1, 1]} : vector<24x4xf32> to vector<8x4xf32>
    %2 = vector.extract_strided_slice %0 {offsets = [8, 0], sizes = [4, 4], strides = [1, 1]} : vector<24x4xf32> to vector<4x4xf32>
    %3 = vector.extract_strided_slice %0 {offsets = [12, 0], sizes = [4, 4], strides = [1, 1]} : vector<24x4xf32> to vector<4x4xf32>
    %4 = vector.extract_strided_slice %0 {offsets = [16, 0], sizes = [1, 4], strides = [1, 1]} : vector<24x4xf32> to vector<1x4xf32>
    %5 = vector.extract_strided_slice %1 {offsets = [0, 0], sizes = [8, 1], strides = [1, 1]} : vector<8x4xf32> to vector<8x1xf32>
    %6 = vector.extract_strided_slice %2 {offsets = [0, 0], sizes = [1, 4], strides = [1, 1]} : vector<4x4xf32> to vector<1x4xf32>
    %7 = vector.broadcast %5 : vector<8x1xf32> to vector<8x4xf32>
    %8 = vector.broadcast %6 : vector<1x4xf32> to vector<8x4xf32>
    %9 = arith.mulf %7, %8 : vector<8x4xf32>
    %10 = vector.extract_strided_slice %1 {offsets = [0, 1], sizes = [8, 1], strides = [1, 1]} : vector<8x4xf32> to vector<8x1xf32>
    %11 = vector.extract_strided_slice %2 {offsets = [1, 0], sizes = [1, 4], strides = [1, 1]} : vector<4x4xf32> to vector<1x4xf32>
    %12 = vector.broadcast %10 : vector<8x1xf32> to vector<8x4xf32>
    %13 = vector.broadcast %11 : vector<1x4xf32> to vector<8x4xf32>
    %14 = arith.mulf %12, %13 : vector<8x4xf32>
    %15 = vector.extract_strided_slice %1 {offsets = [0, 2], sizes = [8, 1], strides = [1, 1]} : vector<8x4xf32> to vector<8x1xf32>
    %16 = vector.extract_strided_slice %2 {offsets = [2, 0], sizes = [1, 4], strides = [1, 1]} : vector<4x4xf32> to vector<1x4xf32>
    %17 = vector.broadcast %15 : vector<8x1xf32> to vector<8x4xf32>
    %18 = vector.broadcast %16 : vector<1x4xf32> to vector<8x4xf32>
    %19 = arith.mulf %17, %18 : vector<8x4xf32>
    %20 = vector.extract_strided_slice %1 {offsets = [0, 3], sizes = [8, 1], strides = [1, 1]} : vector<8x4xf32> to vector<8x1xf32>
    %21 = vector.extract_strided_slice %2 {offsets = [3, 0], sizes = [1, 4], strides = [1, 1]} : vector<4x4xf32> to vector<1x4xf32>
    %22 = vector.broadcast %20 : vector<8x1xf32> to vector<8x4xf32>
    %23 = vector.broadcast %21 : vector<1x4xf32> to vector<8x4xf32>
    %24 = arith.mulf %22, %23 : vector<8x4xf32>
    %25 = arith.addf %9, %14 : vector<8x4xf32>
    %26 = arith.addf %19, %24 : vector<8x4xf32>
    %27 = arith.addf %25, %26 : vector<8x4xf32>
    %28 = vector.broadcast %4 : vector<1x4xf32> to vector<8x4xf32>
    %29 = arith.addf %27, %28 : vector<8x4xf32>
    %30 = vector.extract_strided_slice %3 {offsets = [0, 0], sizes = [1, 4], strides = [1, 1]} : vector<4x4xf32> to vector<1x4xf32>
    %31 = vector.extract_strided_slice %3 {offsets = [1, 0], sizes = [1, 4], strides = [1, 1]} : vector<4x4xf32> to vector<1x4xf32>
    %32 = vector.extract_strided_slice %3 {offsets = [2, 0], sizes = [1, 4], strides = [1, 1]} : vector<4x4xf32> to vector<1x4xf32>
    %33 = vector.extract_strided_slice %3 {offsets = [3, 0], sizes = [1, 4], strides = [1, 1]} : vector<4x4xf32> to vector<1x4xf32>
    %34 = vector.extract_strided_slice %29 {offsets = [0, 0], sizes = [1, 4], strides = [1, 1]} : vector<8x4xf32> to vector<1x4xf32>
    %35 = math.tanh %34 : vector<1x4xf32>
    %36 = vector.extract_strided_slice %29 {offsets = [1, 0], sizes = [1, 4], strides = [1, 1]} : vector<8x4xf32> to vector<1x4xf32>
    %37 = vector.extract_strided_slice %35 {offsets = [0, 0], sizes = [1, 1], strides = [1, 1]} : vector<1x4xf32> to vector<1x1xf32>
    %38 = vector.broadcast %37 : vector<1x1xf32> to vector<1x4xf32>
    %39 = arith.mulf %38, %30 : vector<1x4xf32>
    %40 = vector.extract_strided_slice %35 {offsets = [0, 1], sizes = [1, 1], strides = [1, 1]} : vector<1x4xf32> to vector<1x1xf32>
    %41 = vector.broadcast %40 : vector<1x1xf32> to vector<1x4xf32>
    %42 = arith.mulf %41, %31 : vector<1x4xf32>
    %43 = vector.extract_strided_slice %35 {offsets = [0, 2], sizes = [1, 1], strides = [1, 1]} : vector<1x4xf32> to vector<1x1xf32>
    %44 = vector.broadcast %43 : vector<1x1xf32> to vector<1x4xf32>
    %45 = arith.mulf %44, %32 : vector<1x4xf32>
    %46 = vector.extract_strided_slice %35 {offsets = [0, 3], sizes = [1, 1], strides = [1, 1]} : vector<1x4xf32> to vector<1x1xf32>
    %47 = vector.broadcast %46 : vector<1x1xf32> to vector<1x4xf32>
    %48 = arith.mulf %47, %33 : vector<1x4xf32>
    %49 = arith.addf %39, %42 : vector<1x4xf32>
    %50 = arith.addf %45, %48 : vector<1x4xf32>
    %51 = arith.addf %49, %50 : vector<1x4xf32>
    %52 = arith.addf %36, %51 : vector<1x4xf32>
    %53 = math.tanh %52 : vector<1x4xf32>
    %54 = vector.extract_strided_slice %29 {offsets = [2, 0], sizes = [1, 4], strides = [1, 1]} : vector<8x4xf32> to vector<1x4xf32>
    %55 = vector.extract_strided_slice %53 {offsets = [0, 0], sizes = [1, 1], strides = [1, 1]} : vector<1x4xf32> to vector<1x1xf32>
    %56 = vector.broadcast %55 : vector<1x1xf32> to vector<1x4xf32>
    %57 = arith.mulf %56, %30 : vector<1x4xf32>
    %58 = vector.extract_strided_slice %53 {offsets = [0, 1], sizes = [1, 1], strides = [1, 1]} : vector<1x4xf32> to vector<1x1xf32>
    %59 = vector.broadcast %58 : vector<1x1xf32> to vector<1x4xf32>
    %60 = arith.mulf %59, %31 : vector<1x4xf32>
    %61 = vector.extract_strided_slice %53 {offsets = [0, 2], sizes = [1, 1], strides = [1, 1]} : vector<1x4xf32> to vector<1x1xf32>
    %62 = vector.broadcast %61 : vector<1x1xf32> to vector<1x4xf32>
    %63 = arith.mulf %62, %32 : vector<1x4xf32>
    %64 = vector.extract_strided_slice %53 {offsets = [0, 3], sizes = [1, 1], strides = [1, 1]} : vector<1x4xf32> to vector<1x1xf32>
    %65 = vector.broadcast %64 : vector<1x1xf32> to vector<1x4xf32>
    %66 = arith.mulf %65, %33 : vector<1x4xf32>
    %67 = arith.addf %57, %60 : vector<1x4xf32>
    %68 = arith.addf %63, %66 : vector<1x4xf32>
    %69 = arith.addf %67, %68 : vector<1x4xf32>
    %70 = arith.addf %54, %69 : vector<1x4xf32>
    %71 = math.tanh %70 : vector<1x4xf32>
    %72 = vector.extract_strided_slice %29 {offsets = [3, 0], sizes = [1, 4], strides = [1, 1]} : vector<8x4xf32> to vector<1x4xf32>
    %73 = vector.extract_strided_slice %71 {offsets = [0, 0], sizes = [1, 1], strides = [1, 1]} : vector<1x4xf32> to vector<1x1xf32>
    %74 = vector.broadcast %73 : vector<1x1xf32> to vector<1x4xf32>
    %75 = arith.mulf %74, %30 : vector<1x4xf32>
    %76 = vector.extract_strided_slice %71 {offsets = [0, 1], sizes = [1, 1], strides = [1, 1]} : vector<1x4xf32> to vector<1x1xf32>
    %77 = vector.broadcast %76 : vector<1x1xf32> to vector<1x4xf32>
    %78 = arith.mulf %77, %31 : vector<1x4xf32>
    %79 = vector.extract_strided_slice %71 {offsets = [0, 2], sizes = [1, 1], strides = [1, 1]} : vector<1x4xf32> to vector<1x1xf32>
    %80 = vector.broadcast %79 : vector<1x1xf32> to vector<1x4xf32>
    %81 = arith.mulf %80, %32 : vector<1x4xf32>
    %82 = vector.extract_strided_slice %71 {offsets = [0, 3], sizes = [1, 1], strides = [1, 1]} : vector<1x4xf32> to vector<1x1xf32>
    %83 = vector.broadcast %82 : vector<1x1xf32> to vector<1x4xf32>
    %84 = arith.mulf %83, %33 : vector<1x4xf32>
    %85 = arith.addf %75, %78 : vector<1x4xf32>
    %86 = arith.addf %81, %84 : vector<1x4xf32>
    %87 = arith.addf %85, %86 : vector<1x4xf32>
    %88 = arith.addf %72, %87 : vector<1x4xf32>
    %89 = math.tanh %88 : vector<1x4xf32>
    %90 = vector.extract_strided_slice %29 {offsets = [4, 0], sizes = [1, 4], strides = [1, 1]} : vector<8x4xf32> to vector<1x4xf32>
    %91 = vector.extract_strided_slice %89 {offsets = [0, 0], sizes = [1, 1], strides = [1, 1]} : vector<1x4xf32> to vector<1x1xf32>
    %92 = vector.broadcast %91 : vector<1x1xf32> to vector<1x4xf32>
    %93 = arith.mulf %92, %30 : vector<1x4xf32>
    %94 = vector.extract_strided_slice %89 {offsets = [0, 1], sizes = [1, 1], strides = [1, 1]} : vector<1x4xf32> to vector<1x1xf32>
    %95 = vector.broadcast %94 : vector<1x1xf32> to vector<1x4xf32>
    %96 = arith.mulf %95, %31 : vector<1x4xf32>
    %97 = vector.extract_strided_slice %89 {offsets = [0, 2], sizes = [1, 1], strides = [1, 1]} : vector<1x4xf32> to vector<1x1xf32>
    %98 = vector.broadcast %97 : vector<1x1xf32> to vector<1x4xf32>
    %99 = arith.mulf %98, %32 : vector<1x4xf32>
    %100 = vector.extract_strided_slice %89 {offsets = [0, 3], sizes = [1, 1], strides = [1, 1]} : vector<1x4xf32> to vector<1x1xf32>
    %101 = vector.broadcast %100 : vector<1x1xf32> to vector<1x4xf32>
    %102 = arith.mulf %101, %33 : vector<1x4xf32>
    %103 = arith.addf %93, %96 : vector<1x4xf32>
    %104 = arith.addf %99, %102 : vector<1x4xf32>
    %105 = arith.addf %103, %104 : vector<1x4xf32>
    %106 = arith.addf %90, %105 : vector<1x4xf32>
    %107 = math.tanh %106 : vector<1x4xf32>
    %108 = vector.extract_strided_slice %29 {offsets = [5, 0], sizes = [1, 4], strides = [1, 1]} : vector<8x4xf32> to vector<1x4xf32>
    %109 = vector.extract_strided_slice %107 {offsets = [0, 0], sizes = [1, 1], strides = [1, 1]} : vector<1x4xf32> to vector<1x1xf32>
    %110 = vector.broadcast %109 : vector<1x1xf32> to vector<1x4xf32>
    %111 = arith.mulf %110, %30 : vector<1x4xf32>
    %112 = vector.extract_strided_slice %107 {offsets = [0, 1], sizes = [1, 1], strides = [1, 1]} : vector<1x4xf32> to vector<1x1xf32>
    %113 = vector.broadcast %112 : vector<1x1xf32> to vector<1x4xf32>
    %114 = arith.mulf %113, %31 : vector<1x4xf32>
    %115 = vector.extract_strided_slice %107 {offsets = [0, 2], sizes = [1, 1], strides = [1, 1]} : vector<1x4xf32> to vector<1x1xf32>
    %116 = vector.broadcast %115 : vector<1x1xf32> to vector<1x4xf32>
    %117 = arith.mulf %116, %32 : vector<1x4xf32>
    %118 = vector.extract_strided_slice %107 {offsets = [0, 3], sizes = [1, 1], strides = [1, 1]} : vector<1x4xf32> to vector<1x1xf32>
    %119 = vector.broadcast %118 : vector<1x1xf32> to vector<1x4xf32>
    %120 = arith.mulf %119, %33 : vector<1x4xf32>
    %121 = arith.addf %111, %114 : vector<1x4xf32>
    %122 = arith.addf %117, %120 : vector<1x4xf32>
    %123 = arith.addf %121, %122 : vector<1x4xf32>
    %124 = arith.addf %108, %123 : vector<1x4xf32>
    %125 = math.tanh %124 : vector<1x4xf32>
    %126 = vector.extract_strided_slice %29 {offsets = [6, 0], sizes = [1, 4], strides = [1, 1]} : vector<8x4xf32> to vector<1x4xf32>
    %127 = vector.extract_strided_slice %125 {offsets = [0, 0], sizes = [1, 1], strides = [1, 1]} : vector<1x4xf32> to vector<1x1xf32>
    %128 = vector.broadcast %127 : vector<1x1xf32> to vector<1x4xf32>
    %129 = arith.mulf %128, %30 : vector<1x4xf32>
    %130 = vector.extract_strided_slice %125 {offsets = [0, 1], sizes = [1, 1], strides = [1, 1]} : vector<1x4xf32> to vector<1x1xf32>
    %131 = vector.broadcast %130 : vector<1x1xf32> to vector<1x4xf32>
    %132 = arith.mulf %131, %31 : vector<1x4xf32>
    %133 = vector.extract_strided_slice %125 {offsets = [0, 2], sizes = [1, 1], strides = [1, 1]} : vector<1x4xf32> to vector<1x1xf32>
    %134 = vector.broadcast %133 : vector<1x1xf32> to vector<1x4xf32>
    %135 = arith.mulf %134, %32 : vector<1x4xf32>
    %136 = vector.extract_strided_slice %125 {offsets = [0, 3], sizes = [1, 1], strides = [1, 1]} : vector<1x4xf32> to vector<1x1xf32>
    %137 = vector.broadcast %136 : vector<1x1xf32> to vector<1x4xf32>
    %138 = arith.mulf %137, %33 : vector<1x4xf32>
    %139 = arith.addf %129, %132 : vector<1x4xf32>
    %140 = arith.addf %135, %138 : vector<1x4xf32>
    %141 = arith.addf %139, %140 : vector<1x4xf32>
    %142 = arith.addf %126, %141 : vector<1x4xf32>
    %143 = math.tanh %142 : vector<1x4xf32>
    %144 = vector.extract_strided_slice %29 {offsets = [7, 0], sizes = [1, 4], strides = [1, 1]} : vector<8x4xf32> to vector<1x4xf32>
    %145 = vector.extract_strided_slice %143 {offsets = [0, 0], sizes = [1, 1], strides = [1, 1]} : vector<1x4xf32> to vector<1x1xf32>
    %146 = vector.broadcast %145 : vector<1x1xf32> to vector<1x4xf32>
    %147 = arith.mulf %146, %30 : vector<1x4xf32>
    %148 = vector.extract_strided_slice %143 {offsets = [0, 1], sizes = [1, 1], strides = [1, 1]} : vector<1x4xf32> to vector<1x1xf32>
    %149 = vector.broadcast %148 : vector<1x1xf32> to vector<1x4xf32>
    %150 = arith.mulf %149, %31 : vector<1x4xf32>
    %151 = vector.extract_strided_slice %143 {offsets = [0, 2], sizes = [1, 1], strides = [1, 1]} : vector<1x4xf32> to vector<1x1xf32>
    %152 = vector.broadcast %151 : vector<1x1xf32> to vector<1x4xf32>
    %153 = arith.mulf %152, %32 : vector<1x4xf32>
    %154 = vector.extract_strided_slice %143 {offsets = [0, 3], sizes = [1, 1], strides = [1, 1]} : vector<1x4xf32> to vector<1x1xf32>
    %155 = vector.broadcast %154 : vector<1x1xf32> to vector<1x4xf32>
    %156 = arith.mulf %155, %33 : vector<1x4xf32>
    %157 = arith.addf %147, %150 : vector<1x4xf32>
    %158 = arith.addf %153, %156 : vector<1x4xf32>
    %159 = arith.addf %157, %158 : vector<1x4xf32>
    %160 = arith.addf %144, %159 : vector<1x4xf32>
    %161 = math.tanh %160 : vector<1x4xf32>
    %162 = tpu.concatenate %35, %53, %71, %89, %107, %125, %143, %161 in 0 : vector<1x4xf32>, vector<1x4xf32>, vector<1x4xf32>, vector<1x4xf32>, vector<1x4xf32>, vector<1x4xf32>, vector<1x4xf32>, vector<1x4xf32> -> vector<8x4xf32>
    %c0_1 = arith.constant 0 : index
    %c0_2 = arith.constant 0 : index
    %163 = vector.load %arg1[%c0_1, %c0_2] : memref<8x4xf32, #tpu.memory_space<vmem>>, vector<8x4xf32>
    tpu.vector_store %arg1[%c0_1, %c0_2], %162 {strides = array<i32>} : memref<8x4xf32, #tpu.memory_space<vmem>>, vector<8x4xf32>,
    return
  }
}

</mosaic_0001>

<llo_original>
// kernel: tpu_custom_call.1
$region0: #{tpu_custom_call.1}
  #allocation0 [shape = 'u32[]', space=smem, size = 0x4, offset = 0x4, fixed_abs, tag = 'smem constant byte address 0x4 - core index']
  #allocation1 [shape = 'u32[72,128]{1,0:T(1,128)}', space=vmem, size = 0x9000, scoped, tag = 'internal scratch']
  %s0 = inlined_call_operand.vmem [shape: f32[24,4], index: 0, kind: input, shape index: {}]
  %s1 = inlined_call_operand.vmem [shape: f32[8,4], index: 1, kind: output, shape index: {}]
  %s2 = sld [smem:[#allocation0]]
  $region14: #{tpu_custom_call.1} parent=0
    _
  %s4 = ssub.s32 1, %s2
  %s5 = scalar_select 0, %s4, %s2
  // Predicated region
  $region2: #{tpu_custom_call.1} parent=0 // pred_check
    _
  $region3: #{tpu_custom_call.1} parent=0 // pred_check_branch
    %7 = sbr.rel (0) target = $region5
  $region4: #{tpu_custom_call.1} parent=0 // pred_region
    _
  $region5: #{tpu_custom_call.1} parent=0 // pred_fallthru
    _
  %v8 = vld [vmem:[%s0] sm:$0xff]
  %v9 = vld [vmem:[%s0 + $0x8] sm:$0xff]
  %v10 = vld [vmem:[%s0 + $0x10] sm:$0xff]
  %12 = vset.pattern.permute.xlu0 0
  %13 = vperm.xlu0 %12, %v8
  %v14 = vpop.permute.xlu0 %13
  %v16 = vperm.slane %v9, 0
  %v17 = vmul.f32 %v14, %v16
  %18 = vset.pattern.permute.xlu0 1
  %19 = vperm.xlu0 %18, %v8
  %v20 = vpop.permute.xlu0 %19
  %v22 = vperm.slane %v9, 1
  %v23 = vmul.f32 %v20, %v22
  %24 = vset.pattern.permute.xlu0 2
  %25 = vperm.xlu0 %24, %v8
  %v26 = vpop.permute.xlu0 %25
  %v28 = vperm.slane %v9, 2
  %v29 = vmul.f32 %v26, %v28
  %30 = vset.pattern.permute.xlu0 3
  %31 = vperm.xlu0 %30, %v8
  %v32 = vpop.permute.xlu0 %31
  %v34 = vperm.slane %v9, 3
  %v35 = vmul.f32 %v32, %v34
  %v36 = vadd.f32 %v17, %v23
  %v37 = vadd.f32 %v29, %v35
  %v38 = vadd.f32 %v36, %v37
  %v39 = vperm.slane %v10, 0
  %v40 = vadd.f32 %v38, %v39
  %v41 = vtanh.pop %v40
  %43 = vset.pattern.permute.xlu0 0
  %44 = vperm.xlu0 %43, %v41
  %v45 = vpop.permute.xlu0 %44
  %v48 = vrot.slane %v9, 4
  %v50 = vmul.f32 %v45, %v48
  %51 = vset.pattern.permute.xlu0 1
  %52 = vperm.xlu0 %51, %v41
  %v53 = vpop.permute.xlu0 %52
  %v55 = vrot.slane %v9, 5
  %v57 = vmul.f32 %v53, %v55
  %58 = vset.pattern.permute.xlu0 2
  %59 = vperm.xlu0 %58, %v41
  %v60 = vpop.permute.xlu0 %59
  %v62 = vrot.slane %v9, 6
  %v64 = vmul.f32 %v60, %v62
  %65 = vset.pattern.permute.xlu0 3
  %66 = vperm.xlu0 %65, %v41
  %v67 = vpop.permute.xlu0 %66
  %v69 = vrot.slane %v9, 7
  %v71 = vmul.f32 %v67, %v69
  %v72 = vadd.f32 %v50, %v57
  %v73 = vadd.f32 %v64, %v71
  %v74 = vadd.f32 %v72, %v73
  %v76 = vrot.slane %v74, 7
  %v78 = vadd.f32 %v40, %v76
  %v79 = vtanh.pop %v78
  %81 = vset.pattern.permute.xlu0 0
  %82 = vperm.xlu0 %81, %v79
  %v83 = vpop.permute.xlu0 %82
  %v85 = vrot.slane %v9, 3
  %v87 = vmul.f32 %v83, %v85
  %88 = vset.pattern.permute.xlu0 1
  %89 = vperm.xlu0 %88, %v79
  %v90 = vpop.permute.xlu0 %89
  %v92 = vmul.f32 %v90, %v48
  %93 = vset.pattern.permute.xlu0 2
  %94 = vperm.xlu0 %93, %v79
  %v95 = vpop.permute.xlu0 %94
  %v97 = vmul.f32 %v95, %v55
  %98 = vset.pattern.permute.xlu0 3
  %99 = vperm.xlu0 %98, %v79
  %v100 = vpop.permute.xlu0 %99
  %v102 = vmul.f32 %v100, %v62
  %v103 = vadd.f32 %v87, %v92
  %v104 = vadd.f32 %v97, %v102
  %v105 = vadd.f32 %v103, %v104
  %v107 = vrot.slane %v105, 7
  %v109 = vadd.f32 %v40, %v107
  %v110 = vtanh.pop %v109
  %112 = vset.pattern.permute.xlu0 0
  %113 = vperm.xlu0 %112, %v110
  %v114 = vpop.permute.xlu0 %113
  %v116 = vrot.slane %v9, 2
  %v118 = vmul.f32 %v114, %v116
  %119 = vset.pattern.permute.xlu0 1
  %120 = vperm.xlu0 %119, %v110
  %v121 = vpop.permute.xlu0 %120
  %v123 = vmul.f32 %v121, %v85
  %124 = vset.pattern.permute.xlu0 2
  %125 = vperm.xlu0 %124, %v110
  %v126 = vpop.permute.xlu0 %125
  %v128 = vmul.f32 %v126, %v48
  %129 = vset.pattern.permute.xlu0 3
  %130 = vperm.xlu0 %129, %v110
  %v131 = vpop.permute.xlu0 %130
  %v133 = vmul.f32 %v131, %v55
  %v134 = vadd.f32 %v118, %v123
  %v135 = vadd.f32 %v128, %v133
  %v136 = vadd.f32 %v134, %v135
  %v138 = vrot.slane %v136, 7
  %v140 = vadd.f32 %v40, %v138
  %v141 = vtanh.pop %v140
  %143 = vset.pattern.permute.xlu0 0
  %144 = vperm.xlu0 %143, %v141
  %v145 = vpop.permute.xlu0 %144
  %v147 = vrot.slane %v9, 1
  %v149 = vmul.f32 %v145, %v147
  %150 = vset.pattern.permute.xlu0 1
  %151 = vperm.xlu0 %150, %v141
  %v152 = vpop.permute.xlu0 %151
  %v154 = vmul.f32 %v152, %v116
  %155 = vset.pattern.permute.xlu0 2
  %156 = vperm.xlu0 %155, %v141
  %v157 = vpop.permute.xlu0 %156
  %v159 = vmul.f32 %v157, %v85
  %160 = vset.pattern.permute.xlu0 3
  %161 = vperm.xlu0 %160, %v141
  %v162 = vpop.permute.xlu0 %161
  %v164 = vmul.f32 %v162, %v48
  %v165 = vadd.f32 %v149, %v154
  %v166 = vadd.f32 %v159, %v164
  %v167 = vadd.f32 %v165, %v166
  %v169 = vrot.slane %v167, 7
  %v171 = vadd.f32 %v40, %v169
  %v172 = vtanh.pop %v171
  %174 = vset.pattern.permute.xlu0 0
  %175 = vperm.xlu0 %174, %v172
  %v176 = vpop.permute.xlu0 %175
  %v178 = vmul.f32 %v176, %v9
  %179 = vset.pattern.permute.xlu0 1
  %180 = vperm.xlu0 %179, %v172
  %v181 = vpop.permute.xlu0 %180
  %v183 = vmul.f32 %v181, %v147
  %184 = vset.pattern.permute.xlu0 2
  %185 = vperm.xlu0 %184, %v172
  %v186 = vpop.permute.xlu0 %185
  %v188 = vmul.f32 %v186, %v116
  %189 = vset.pattern.permute.xlu0 3
  %190 = vperm.xlu0 %189, %v172
  %v191 = vpop.permute.xlu0 %190
  %v193 = vmul.f32 %v191, %v85
  %v194 = vadd.f32 %v178, %v183
  %v195 = vadd.f32 %v188, %v193
  %v196 = vadd.f32 %v194, %v195
  %v198 = vrot.slane %v196, 7
  %v200 = vadd.f32 %v40, %v198
  %v201 = vtanh.pop %v200
  %203 = vset.pattern.permute.xlu0 0
  %204 = vperm.xlu0 %203, %v201
  %v205 = vpop.permute.xlu0 %204
  %v207 = vmul.f32 %v205, %v69
  %208 = vset.pattern.permute.xlu0 1
  %209 = vperm.xlu0 %208, %v201
  %v210 = vpop.permute.xlu0 %209
  %v212 = vmul.f32 %v210, %v9
  %213 = vset.pattern.permute.xlu0 2
  %214 = vperm.xlu0 %213, %v201
  %v215 = vpop.permute.xlu0 %214
  %v217 = vmul.f32 %v215, %v147
  %218 = vset.pattern.permute.xlu0 3
  %219 = vperm.xlu0 %218, %v201
  %v220 = vpop.permute.xlu0 %219
  %v222 = vmul.f32 %v220, %v116
  %v223 = vadd.f32 %v207, %v212
  %v224 = vadd.f32 %v217, %v222
  %v225 = vadd.f32 %v223, %v224
  %v227 = vrot.slane %v225, 7
  %v229 = vadd.f32 %v40, %v227
  %v230 = vtanh.pop %v229
  %232 = vset.pattern.permute.xlu0 0
  %233 = vperm.xlu0 %232, %v230
  %v234 = vpop.permute.xlu0 %233
  %v236 = vmul.f32 %v234, %v62
  %237 = vset.pattern.permute.xlu0 1
  %238 = vperm.xlu0 %237, %v230
  %v239 = vpop.permute.xlu0 %238
  %v241 = vmul.f32 %v239, %v69
  %242 = vset.pattern.permute.xlu0 2
  %243 = vperm.xlu0 %242, %v230
  %v244 = vpop.permute.xlu0 %243
  %v246 = vmul.f32 %v244, %v9
  %247 = vset.pattern.permute.xlu0 3
  %248 = vperm.xlu0 %247, %v230
  %v249 = vpop.permute.xlu0 %248
  %v251 = vmul.f32 %v249, %v147
  %v252 = vadd.f32 %v236, %v241
  %v253 = vadd.f32 %v246, %v251
  %v254 = vadd.f32 %v252, %v253
  %v256 = vrot.slane %v254, 7
  %v258 = vadd.f32 %v40, %v256
  %v259 = vtanh.pop %v258
  %vm260 = vcmask 1040384
  %v261 = vsel %vm260, %v41, %v79
  %vm262 = vcmask 1041408
  %v263 = vsel %vm262, %v261, %v110
  %vm264 = vcmask 1042432
  %v265 = vsel %vm264, %v263, %v141
  %vm266 = vcmask 1043456
  %v267 = vsel %vm266, %v265, %v172
  %vm268 = vcmask 1044480
  %v269 = vsel %vm268, %v267, %v201
  %vm270 = vcmask 1045504
  %v271 = vsel %vm270, %v269, %v230
  %vm272 = vcmask 1046528
  %v273 = vsel %vm272, %v271, %v259
  %vm274 = vcmask 31744
  %275 = vst.msk [vmem:[%s1] sm:$0xff] %vm274, %v273
  // Predicated region
  $region6: #{tpu_custom_call.1} parent=0 // pred_check
    _
  $region7: #{tpu_custom_call.1} parent=0 // pred_check_branch
    %277 = sbr.rel (0) target = $region9
  $region8: #{tpu_custom_call.1} parent=0 // pred_region
    _
  $region9: #{tpu_custom_call.1} parent=0 // pred_fallthru
    _
  // Predicated region
  $region10: #{tpu_custom_call.1} parent=0 // pred_check
    _
  $region11: #{tpu_custom_call.1} parent=0 // pred_check_branch
    %279 = sbr.rel (0) target = $region13
  $region12: #{tpu_custom_call.1} parent=0 // pred_region
    _
  $region13: #{tpu_custom_call.1} parent=0 // pred_fallthru
    _

</llo_original>
